<compile_context>
chip_gen: v6e
topology: v6e:2x2x1
jax: 0.10.0
libtpu: 0.0.40
codegen_flags: <defaults>
</compile_context>

<pallas_src>
import jax
import jax.numpy as jnp
from jax.experimental import pallas as pl
from jax.experimental.pallas import tpu as pltpu


def _make_gap_kernel(rem):
    """Build the GAP kernel.

    `rem` = HW % THW (static). If nonzero, the last spatial tile is ragged and
    its out-of-bounds lanes are masked before accumulation (only on that tile).
    """

    def _accumulate(x_ref, acc_ref, masked):
        tile = x_ref[...]                                     # (TB, C, THW)
        if masked:
            lane = jax.lax.broadcasted_iota(jnp.int32, tile.shape, 2)
            tile = jnp.where(lane < rem, tile, 0)
        acc_ref[...] += jnp.sum(tile, axis=-1, dtype=jnp.float32)

    def kernel(x_ref, w_ref, b_ref, o_ref, acc_ref):
        # x_ref:   (TB, C, THW)  spatial tile for TB batch rows
        # w_ref:   (C, K)        1x1-conv weights, pre-scaled by 1/(H*W), f32
        # b_ref:   (1, K)        conv bias, f32
        # o_ref:   (1, TB, K)    output logits block (f32)
        # acc_ref: (TB, C)       f32 running spatial sums (VMEM scratch)
        t = pl.program_id(1)
        last = pl.num_programs(1) - 1

        @pl.when(t == 0)
        def _():
            acc_ref[...] = jnp.zeros_like(acc_ref)

        if rem == 0:
            _accumulate(x_ref, acc_ref, masked=False)
        else:
            @pl.when(t != last)
            def _():
                _accumulate(x_ref, acc_ref, masked=False)

            @pl.when(t == last)
            def _():
                _accumulate(x_ref, acc_ref, masked=True)

        @pl.when(t == last)
        def _():
            # (TB, C) @ (C, K): the 1x1 conv; the pooling 1/(H*W) is folded in.
            logits = jnp.dot(acc_ref[...], w_ref[...],
                             preferred_element_type=jnp.float32)
            o_ref[...] = (logits + b_ref[...])[None].astype(o_ref.dtype)

    return kernel


def _vmem_ceiling_bytes():
    """Max scoped-VMEM we are willing to ask for, generation-aware."""
    try:
        cap = int(pltpu.get_tpu_info().vmem_capacity_bytes)
    except Exception:
        cap = 128 << 20
    # 25% headroom for Mosaic internals; never more than 64 MiB
    # (=> 48 MiB on v7x, which only has 64 MiB physical VMEM).
    return min((cap * 3) // 4, 64 << 20)


def _pick_tiles(B, C, HW, itemsize, target_bytes):
    """Choose (TB, THW, rem).

    Small images: whole image per step, several batch rows blocked per step
    (TB need NOT divide B; the last batch block is ragged). Large images:
    one image per step, lane-dense spatial tiles of ~target_bytes with a
    masked ragged last tile (rem = HW % THW).
    """
    per_image = C * HW * itemsize
    if per_image <= target_bytes or HW <= 128:
        tb = int(max(1, min(target_bytes // max(per_image, 1), 1024)))
        tb = min(tb, B)
        if B >= 2:
            # Keep >= 2 iterations on the "parallel" batch axis (v7x megacore).
            tb = min(tb, -(-B // 2))
        return tb, HW, 0
    # Spatial tiling: lane-dense (multiple of 128) tile of ~target_bytes.
    max_lanes = max(128, ((target_bytes // (C * itemsize)) // 128) * 128)
    thw = max(128, min(max_lanes, (HW // 128) * 128))
    rem = HW % thw
    return 1, thw, rem


def gap_forward(x_nchw, conv_w, conv_b, *, support_background=False,
                _target_bytes=None):
    """x_nchw: [B, C, H, W]; conv_w: [K, C, 1, 1]; conv_b: [K].

    Returns logits [B, classes] (f32), matching GAP.forward (minus the CAM stash).
    """
    B, C, H, W = x_nchw.shape
    K = conv_w.shape[0]
    HW = H * W

    # Pure reshape of NCHW -> [B, C, HW]; no HBM copy, HW lands on lanes.
    x = x_nchw.reshape(B, C, HW)

    # Tiny parameter glue: [K, C, 1, 1] -> [C, K] with 1/(H*W) folded in.
    w_ck = (jnp.transpose(conv_w.reshape(K, C), (1, 0)).astype(jnp.float32)
            * (1.0 / float(HW)))
    b_1k = conv_b.reshape(1, K).astype(jnp.float32)

    itemsize = jnp.dtype(x.dtype).itemsize
    vmem_ceiling = _vmem_ceiling_bytes()
    if _target_bytes is None:
        target_bytes = max(1 << 20, min(8 << 20, (vmem_ceiling - (4 << 20)) // 2))
    else:
        target_bytes = int(_target_bytes)

    TB, thw, rem = _pick_tiles(B, C, HW, itemsize, target_bytes)
    n_b = pl.cdiv(B, TB)
    n_t = pl.cdiv(HW, thw)

    # Only raise the scoped-VMEM limit when the double-buffered input block
    # needs it; never above the generation-aware ceiling.
    block_bytes = TB * C * thw * itemsize
    cparams = dict(dimension_semantics=("parallel", "arbitrary"))
    need = 2 * block_bytes + (2 << 20)
    if need > (16 << 20):
        cparams["vmem_limit_bytes"] = int(
            min(max(need + (2 << 20), 32 << 20), vmem_ceiling))

    kernel = _make_gap_kernel(rem)
    out3 = pl.pallas_call(
        kernel,
        out_shape=jax.ShapeDtypeStruct((n_b, TB, K), jnp.float32),
        grid_spec=pltpu.PrefetchScalarGridSpec(
            num_scalar_prefetch=0,
            grid=(n_b, n_t),
            in_specs=[
                pl.BlockSpec((TB, C, thw), lambda b, t: (b, 0, t)),
                pl.BlockSpec((C, K), lambda b, t: (0, 0)),
                pl.BlockSpec((1, K), lambda b, t: (0, 0)),
            ],
            out_specs=pl.BlockSpec((1, TB, K), lambda b, t: (b, 0, 0)),
            scratch_shapes=[pltpu.VMEM((TB, C), jnp.float32)],
        ),
        compiler_params=pltpu.CompilerParams(**cparams),
    )(x, w_ck, b_1k)

    # Drop any ragged-batch padding rows (tiny [n_b*TB, K] tensor).
    logits = out3.reshape(n_b * TB, K)[:B]
    if support_background:
        logits = logits[:, 1:]   # correct_cl_logits: drop the background class
    return logits


def _reference(x, conv_w, conv_b, support_background):
    K = conv_w.shape[0]
    ref_conv = jnp.einsum("bchw,kc->bkhw", x, conv_w.reshape(K, -1)) \
        + conv_b[None, :, None, None]
    ref = jnp.mean(ref_conv, axis=(2, 3))
    if support_background:
        ref = ref[:, 1:]
    return ref


if __name__ == "__main__":
    key = jax.random.PRNGKey(0)

    def _run_case(key, B, C, H, W, classes, support_background, target_bytes=None):
        K = classes + 1 if support_background else classes
        kx, kw, kb = jax.random.split(key, 3)
        x = jax.random.normal(kx, (B, C, H, W), dtype=jnp.float32)
        conv_w = jax.random.normal(kw, (K, C, 1, 1), dtype=jnp.float32) * 0.1
        conv_b = jax.random.normal(kb, (K,), dtype=jnp.float32) * 0.1
        out = gap_forward(x, conv_w, conv_b,
                          support_background=support_background,
                          _target_bytes=target_bytes)
        out = jax.block_until_ready(out)
        ref = _reference(x, conv_w, conv_b, support_background)
        assert out.shape == ref.shape, (out.shape, ref.shape)
        assert jnp.allclose(out, ref, atol=1e-5, rtol=1e-5), (out, ref)

    k1, k2, k3 = jax.random.split(key, 3)

    # Main case (matches the module defaults at a small size).
    _run_case(k1, B=2, C=4, H=16, W=16, classes=3, support_background=False)

    # Ragged spatial tile (forces tiling + in-kernel lane masking via a tiny
    # debug tile target) and odd batch size.
    _run_case(k2, B=3, C=8, H=13, W=13, classes=3, support_background=False,
              target_bytes=4096)

    # Ragged batch block (TB=2 over B=3) + background class dropped.
    _run_case(k3, B=3, C=8, H=12, W=12, classes=3, support_background=True)

    print("KERNEL_OK")
</pallas_src>

<mosaic_0001>
module attributes {stable_mosaic.version = 11 : i64} {
  func.func @kernel(%arg0: i32, %arg1: i32, %arg2: memref<1x4x256xf32, #tpu.memory_space<vmem>>, %arg3: memref<4x3xf32, #tpu.memory_space<vmem>>, %arg4: memref<1x3xf32, #tpu.memory_space<vmem>>, %arg5: memref<1x1x3xf32, #tpu.memory_space<vmem>>, %arg6: memref<1x4xf32, #tpu.memory_space<vmem>>) attributes {dimension_semantics = [#tpu.dimension_semantics<parallel>, #tpu.dimension_semantics<arbitrary>], iteration_bounds = array<i64: 2, 1>, scalar_prefetch = 0 : i64, scratch_operands = 1 : i64, tpu.core_type = #tpu.core_type<tc>, window_params = [{transform_indices = @transform_0, window_bounds = array<i64: 1, 4, 256>}, {pipeline_mode = #tpu.pipeline_mode<synchronous>, transform_indices = @transform_1, window_bounds = array<i64: 4, 3>}, {pipeline_mode = #tpu.pipeline_mode<synchronous>, transform_indices = @transform_2, window_bounds = array<i64: 1, 3>}, {transform_indices = @transform_3, window_bounds = array<i64: 1, 1, 3>}]} {
    %c0_i32 = arith.constant 0 : i32
    %0 = arith.cmpi eq, %arg1, %c0_i32 : i32
    %1 = arith.extui %0 : i1 to i32
    %c0_i32_0 = arith.constant 0 : i32
    %2 = arith.cmpi ne, %1, %c0_i32_0 : i32
    scf.if %2 {
      %cst_9 = arith.constant 0.000000e+00 : f32
      %11 = vector.broadcast %cst_9 : f32 to vector<1x4xf32>
      %c0_10 = arith.constant 0 : index
      %c0_11 = arith.constant 0 : index
      %12 = vector.load %arg6[%c0_10, %c0_11] : memref<1x4xf32, #tpu.memory_space<vmem>>, vector<1x4xf32>
      tpu.vector_store %arg6[%c0_10, %c0_11], %11 {strides = array<i32>} : memref<1x4xf32, #tpu.memory_space<vmem>>, vector<1x4xf32>,
    } else {
    }
    %c0 = arith.constant 0 : index
    %c0_1 = arith.constant 0 : index
    %c0_2 = arith.constant 0 : index
    %3 = vector.load %arg2[%c0, %c0_1, %c0_2] : memref<1x4x256xf32, #tpu.memory_space<vmem>>, vector<1x4x256xf32>
    %c0_3 = arith.constant 0 : index
    %c0_4 = arith.constant 0 : index
    %4 = vector.load %arg6[%c0_3, %c0_4] : memref<1x4xf32, #tpu.memory_space<vmem>>, vector<1x4xf32>
    %cst = arith.constant dense<0.000000e+00> : vector<1x4xf32>
    %5 = vector.multi_reduction <add>, %3, %cst [2] : vector<1x4x256xf32> to vector<1x4xf32>
    %6 = arith.addf %4, %5 : vector<1x4xf32>
    %c0_5 = arith.constant 0 : index
    %c0_6 = arith.constant 0 : index
    %7 = vector.load %arg6[%c0_5, %c0_6] : memref<1x4xf32, #tpu.memory_space<vmem>>, vector<1x4xf32>
    tpu.vector_store %arg6[%c0_5, %c0_6], %6 {strides = array<i32>} : memref<1x4xf32, #tpu.memory_space<vmem>>, vector<1x4xf32>,
    %c0_i32_7 = arith.constant 0 : i32
    %8 = arith.cmpi eq, %arg1, %c0_i32_7 : i32
    %9 = arith.extui %8 : i1 to i32
    %c0_i32_8 = arith.constant 0 : i32
    %10 = arith.cmpi ne, %9, %c0_i32_8 : i32
    scf.if %10 {
      %c0_9 = arith.constant 0 : index
      %c0_10 = arith.constant 0 : index
      %11 = vector.load %arg6[%c0_9, %c0_10] : memref<1x4xf32, #tpu.memory_space<vmem>>, vector<1x4xf32>
      %c0_11 = arith.constant 0 : index
      %c0_12 = arith.constant 0 : index
      %12 = vector.load %arg3[%c0_11, %c0_12] : memref<4x3xf32, #tpu.memory_space<vmem>>, vector<4x3xf32>
      %cst_13 = arith.constant dense<0.000000e+00> : vector<1x3xf32>
      %13 = tpu.matmul %11, %12, %cst_13 {dimension_numbers = #tpu.dot_dimension_numbers<[1], [0], [0], [1], [0, 0, 1, 1], [], []>} : vector<1x4xf32>, vector<4x3xf32>, vector<1x3xf32> -> vector<1x3xf32>
      %c0_14 = arith.constant 0 : index
      %c0_15 = arith.constant 0 : index
      %14 = vector.load %arg4[%c0_14, %c0_15] : memref<1x3xf32, #tpu.memory_space<vmem>>, vector<1x3xf32>
      %15 = arith.addf %13, %14 : vector<1x3xf32>
      %16 = vector.shape_cast %15 : vector<1x3xf32> to vector<1x1x3xf32>
      %c0_16 = arith.constant 0 : index
      %c0_17 = arith.constant 0 : index
      %c0_18 = arith.constant 0 : index
      %17 = vector.load %arg5[%c0_16, %c0_17, %c0_18] : memref<1x1x3xf32, #tpu.memory_space<vmem>>, vector<1x1x3xf32>
      tpu.vector_store %arg5[%c0_16, %c0_17, %c0_18], %16 {strides = array<i32>} : memref<1x1x3xf32, #tpu.memory_space<vmem>>, vector<1x1x3xf32>,
    } else {
    }
    return
  }
  func.func @transform_0(%arg0: i32, %arg1: i32) -> (i32, i32, i32) {
    %c0_i32 = arith.constant 0 : i32
    %c0_i32_0 = arith.constant 0 : i32
    return %arg0, %c0_i32, %arg1 : i32, i32, i32
  }
  func.func @transform_1(%arg0: i32, %arg1: i32) -> (i32, i32) {
    %c0_i32 = arith.constant 0 : i32
    %c0_i32_0 = arith.constant 0 : i32
    %c0_i32_1 = arith.constant 0 : i32
    return %c0_i32, %c0_i32_0 : i32, i32
  }
  func.func @transform_2(%arg0: i32, %arg1: i32) -> (i32, i32) {
    %c0_i32 = arith.constant 0 : i32
    %c0_i32_0 = arith.constant 0 : i32
    %c0_i32_1 = arith.constant 0 : i32
    return %c0_i32, %c0_i32_0 : i32, i32
  }
  func.func @transform_3(%arg0: i32, %arg1: i32) -> (i32, i32, i32) {
    %c0_i32 = arith.constant 0 : i32
    %c0_i32_0 = arith.constant 0 : i32
    %c0_i32_1 = arith.constant 0 : i32
    return %arg0, %c0_i32, %c0_i32_0 : i32, i32, i32
  }
}

</mosaic_0001>

<llo_original>
// kernel: tpu_custom_call.1
$region0: #{tpu_custom_call.1}
  #allocation0 [shape = 'u32[]', space=smem, size = 0x4, offset = 0x4, fixed_abs, tag = 'smem constant byte address 0x4 - core index']
  #allocation1 [shape = 'u32[144,128]{1,0:T(1,128)}', space=vmem, size = 0x12000, scoped, tag = 'internal scratch']
  #allocation2 [shape = 'f32[1,4]{1,0:T(1,128)}', space=vmem, size = 0x200, scoped, tag = 'scratch operand']
  %s0 = inlined_call_operand.hbm [shape: f32[2,4,256], index: 0, kind: input, shape index: {}]
  %s1 = inlined_call_operand.hbm [shape: f32[4,3], index: 1, kind: input, shape index: {}]
  %s2 = inlined_call_operand.vmem [shape: f32[1,3], index: 2, kind: input, shape index: {}]
  %s3 = inlined_call_operand.hbm [shape: f32[2,1,3], index: 3, kind: output, shape index: {}]
  %s4 = sld [smem:[#allocation0]]
  $region61: #{tpu_custom_call.1} parent=0
    _
  %s6 = ssub.s32 1, %s4
  %s7 = scalar_select 0, %s6, %s4
  $region1: #{tpu_custom_call.1} parent=0
    #allocation3 [shape = 'u8[8192]{0}', space=vmem, size = 0x2000, scoped, tag = 'input window, operand 0']
    #allocation4 [shape = 's32[2]{0}', space=sflag, size = 0x8, scoped, tag = 'scoped memory for tpu_custom_call.1']
    #allocation5 [shape = 's32[2]{0}', space=sflag, size = 0x8, scoped, tag = 'scoped memory for tpu_custom_call.1']
    #allocation6 [shape = 'u8[2048]{0}', space=vmem, size = 0x800, scoped, tag = 'input window, operand 1, single buffered']
    #allocation7 [shape = 's32[1]{0}', space=sflag, size = 0x4, scoped, tag = 'scoped memory for tpu_custom_call.1']
    #allocation8 [shape = 'u8[1024]{0}', space=vmem, size = 0x400, scoped, tag = 'output window, operand 0']
    %8 = vsyncpa [#allocation4], 0
    %s9 = scalar_lea.sflag [#allocation4], 1
    %10 = vsyncpa %s9, 0
    %11 = vsyncpa [#allocation7], 0
    %12 = vsyncpa [#allocation5], 0
    %s13 = scalar_lea.sflag [#allocation5], 1
    %14 = vsyncpa %s13, 0
    loop: start=0, step=1, limit=4
    $region2: #{tpu_custom_call.1} parent=1 // loop_pre_header
      _
    $region3: #{tpu_custom_call.1} parent=1 // loop_header
      %s16 = sphi 0, %s20
      %p17 = scmp.ge.s32.totalorder %s16, 4
      %s23 = sphi 0, %s35
      %s24 = sphi 0, %s31
      %s25 = sphi 0, %s23
      %s26 = sphi 0, %s24
      %s27 = sphi 0, %s25
      %s28 = sphi 0, %s26
      %s40 = sphi 0, %s42
      %s43 = sphi 0, %s40
      %s44 = sphi 0, %s43
      %s60 = sphi 0, %s44
      %s64 = sphi 0, %s64
      %s66 = sphi 0, %s64
      %s67 = sphi 0, %s66
      %s81 = sphi 0, %s67
      %s85 = sphi 0, %s85
      %s87 = sphi 0, %s85
      %s88 = sphi 0, %s87
      %s102 = sphi 0, %s88
      %s108 = sphi 0, %s110
      %s111 = sphi 0, %s108
      %s112 = sphi 0, %s111
      %s128 = sphi 0, %s112
    $region4: #{tpu_custom_call.1} parent=1 // loop_header_branch
      %19 = sbr.rel (%p17) target = $region8
    $region5: #{tpu_custom_call.1} parent=1 // loop_body
      %s21 = ssub.s32 %s16, 1
      %s22 = ssub.s32 %s16, 2
      %s29 = sadd.s32 1, %s24
      %p30 = scmp.ge.s32.totalorder %s29, 1
      %s31 = scalar_select %p30, 0, %s29
      %s32 = sadd.s32 1, %s23
      %s33 = scalar_select %p30, %s32, %s23
      %p34 = scmp.ge.s32.totalorder %s33, 2
      %s35 = scalar_select %p34, 0, %s33
      %s36 = ssub.s32 %s23, %s35
      %s37 = ssub.s32 %s24, %s31
      %s38 = sor.u32 %s36, %s37
      %p39 = scmp.eq.s32.totalorder %s38, 0
      %s41 = sadd.s32 %s40, 1
      %s42 = scalar_select %p39, %s40, %s41
      %p45 = pneg %p39
      %p46 = scmp.eq.s32.totalorder %s16, 1
      %p47 = por %p45, %p46
      %p48 = scmp.ne.s32.totalorder %s40, %s43
      %p49 = scmp.eq.s32.totalorder %s16, 0
      %p50 = por %p48, %p49
      %p51 = scmp.ne.s32.totalorder %s40, %s43
      %p52 = scmp.eq.s32.totalorder %s21, 1
      %p53 = por %p51, %p52
      %p54 = scmp.ne.s32.totalorder %s43, %s44
      %p55 = scmp.eq.s32.totalorder %s21, 0
      %p56 = por %p54, %p55
      %p57 = scmp.ne.s32.totalorder %s43, %s44
      %p58 = scmp.eq.s32.totalorder %s22, 1
      %p59 = por %p57, %p58
      %p61 = scmp.ne.s32.totalorder %s44, %s60
      %p62 = scmp.eq.s32.totalorder %s22, 0
      %p63 = por %p61, %p62
      %s65 = sadd.s32 %s64, 1
      %p68 = scmp.eq.s32.totalorder %s16, 1
      %p69 = scmp.ne.s32.totalorder %s64, %s66
      %p70 = scmp.eq.s32.totalorder %s16, 0
      %p71 = por %p69, %p70
      %p72 = scmp.ne.s32.totalorder %s64, %s66
      %p73 = scmp.eq.s32.totalorder %s21, 1
      %p74 = por %p72, %p73
      %p75 = scmp.ne.s32.totalorder %s66, %s67
      %p76 = scmp.eq.s32.totalorder %s21, 0
      %p77 = por %p75, %p76
      %p78 = scmp.ne.s32.totalorder %s66, %s67
      %p79 = scmp.eq.s32.totalorder %s22, 1
      %p80 = por %p78, %p79
      %p82 = scmp.ne.s32.totalorder %s67, %s81
      %p83 = scmp.eq.s32.totalorder %s22, 0
      %p84 = por %p82, %p83
      %s86 = sadd.s32 %s85, 1
      %p89 = scmp.eq.s32.totalorder %s16, 1
      %p90 = scmp.ne.s32.totalorder %s85, %s87
      %p91 = scmp.eq.s32.totalorder %s16, 0
      %p92 = por %p90, %p91
      %p93 = scmp.ne.s32.totalorder %s85, %s87
      %p94 = scmp.eq.s32.totalorder %s21, 1
      %p95 = por %p93, %p94
      %p96 = scmp.ne.s32.totalorder %s87, %s88
      %p97 = scmp.eq.s32.totalorder %s21, 0
      %p98 = por %p96, %p97
      %p99 = scmp.ne.s32.totalorder %s87, %s88
      %p100 = scmp.eq.s32.totalorder %s22, 1
      %p101 = por %p99, %p100
      %p103 = scmp.ne.s32.totalorder %s88, %s102
      %p104 = scmp.eq.s32.totalorder %s22, 0
      %p105 = por %p103, %p104
      %s106 = ssub.s32 %s23, %s35
      %p107 = scmp.eq.s32.totalorder %s106, 0
      %s109 = sadd.s32 %s108, 1
      %s110 = scalar_select %p107, %s108, %s109
      %p113 = pneg %p107
      %p114 = scmp.eq.s32.totalorder %s16, 1
      %p115 = por %p113, %p114
      %p116 = scmp.ne.s32.totalorder %s108, %s111
      %p117 = scmp.eq.s32.totalorder %s16, 0
      %p118 = por %p116, %p117
      %p119 = scmp.ne.s32.totalorder %s108, %s111
      %p120 = scmp.eq.s32.totalorder %s21, 1
      %p121 = por %p119, %p120
      %p122 = scmp.ne.s32.totalorder %s111, %s112
      %p123 = scmp.eq.s32.totalorder %s21, 0
      %p124 = por %p122, %p123
      %p125 = scmp.ne.s32.totalorder %s111, %s112
      %p126 = scmp.eq.s32.totalorder %s22, 1
      %p127 = por %p125, %p126
      %p129 = scmp.ne.s32.totalorder %s112, %s128
      %p130 = scmp.eq.s32.totalorder %s22, 0
      %p131 = por %p129, %p130
      %p132 = scmp.le.s32.totalorder 1, %s16
      %p133 = scmp.lt.s32.totalorder %s16, 3
      %p134 = pnand %p132, %p133
      %p135 = pneg %p134
      // Predicated region
      $region9: #{tpu_custom_call.1} parent=5 // pred_check
        _
      $region10: #{tpu_custom_call.1} parent=5 // pred_check_branch
        %137 = sbr.rel (%p134) target = $region12
      $region11: #{tpu_custom_call.1} parent=5 // pred_region
        %s138 = ssub.s32 %s16, 1
        // Predicated region
        $region13: #{tpu_custom_call.1} parent=11 // pred_check
          %p139 = pneg %p77
        $region14: #{tpu_custom_call.1} parent=11 // pred_check_branch
          %141 = sbr.rel (%p139) target = $region16
        $region15: #{tpu_custom_call.1} parent=11 // pred_region
          %s143 = ssub.s32 64, 64
          %144 = vsyncadd [#allocation7], %s143
          %s146 = sshll.u32 [#allocation6], 4
          %s147 = int_to_ptr.vmem [resolvable:$true] %s146
          %149 = dma.hbm_to_vmem [thread:$0]  %s1, 64, %s147, [#allocation7]
        $region16: #{tpu_custom_call.1} parent=11 // pred_fallthru
          _
        // Predicated region
        $region17: #{tpu_custom_call.1} parent=11 // pred_check
          %p150 = pneg %p98
        $region18: #{tpu_custom_call.1} parent=11 // pred_check_branch
          %152 = sbr.rel (%p150) target = $region20
        $region19: #{tpu_custom_call.1} parent=11 // pred_region
          _
        $region20: #{tpu_custom_call.1} parent=11 // pred_fallthru
          _
      $region12: #{tpu_custom_call.1} parent=5 // pred_fallthru
        _
      %p153 = scmp.lt.s32.totalorder %s16, 2
      // Predicated region
      $region21: #{tpu_custom_call.1} parent=5 // pred_check
        %p154 = pneg %p153
      $region22: #{tpu_custom_call.1} parent=5 // pred_check_branch
        %156 = sbr.rel (%p154) target = $region24
      $region23: #{tpu_custom_call.1} parent=5 // pred_region
        // Predicated region
        $region25: #{tpu_custom_call.1} parent=23 // pred_check
          %p157 = pneg %p50
        $region26: #{tpu_custom_call.1} parent=23 // pred_check_branch
          %159 = sbr.rel (%p157) target = $region28
        $region27: #{tpu_custom_call.1} parent=23 // pred_region
          %s160 = sand.u32 %s40, 1
          %s161 = scalar_lea.sflag [#allocation4], %s160
          %s162 = sand.u32 %s40, 1
          %s163 = smul.addr %s162, 8
          %s164 = scalar_lea.vmem [#allocation3], %s163
          %s165 = smul.u32 2, %s24
          %s167 = ssub.s32 128, 128
          %168 = vsyncadd %s161, %s167
          %s169 = smul.addr %s23, 2
          %s170 = sadd.s32 %s165, %s169
          %s171 = smul.addr %s170, 64
          %s172 = scalar_lea.hbm %s0, %s171
          %s174 = sshll.u32 %s164, 4
          %s175 = int_to_ptr.vmem [resolvable:$true] %s174
          %177 = dma.hbm_to_vmem [thread:$0]  %s172, 128, %s175, %s161
        $region28: #{tpu_custom_call.1} parent=23 // pred_fallthru
          _
      $region24: #{tpu_custom_call.1} parent=5 // pred_fallthru
        _
      %p178 = scmp.le.s32.totalorder 1, %s16
      %p179 = scmp.lt.s32.totalorder %s16, 3
      %p180 = pnand %p178, %p179
      %p181 = pneg %p180
      // Predicated region
      $region29: #{tpu_custom_call.1} parent=5 // pred_check
        _
      $region30: #{tpu_custom_call.1} parent=5 // pred_check_branch
        %183 = sbr.rel (%p180) target = $region32
      $region31: #{tpu_custom_call.1} parent=5 // pred_region
        %s184 = ssub.s32 %s16, 1
        %s185 = sand.u32 %s43, 1
        %s186 = scalar_lea.sflag [#allocation4], %s185
        %s187 = sand.u32 %s43, 1
        %s188 = smul.addr %s187, 8
        %s189 = scalar_lea.vmem [#allocation3], %s188
        // Predicated region
        $region33: #{tpu_custom_call.1} parent=31 // pred_check
          %p190 = pneg %p56
        $region34: #{tpu_custom_call.1} parent=31 // pred_check_branch
          %192 = sbr.rel (%p190) target = $region36
        $region35: #{tpu_custom_call.1} parent=31 // pred_region
          %193 = dma.done %s186, 128
        $region36: #{tpu_custom_call.1} parent=31 // pred_fallthru
          _
        // Predicated region
        $region37: #{tpu_custom_call.1} parent=31 // pred_check
          %p194 = pneg %p77
        $region38: #{tpu_custom_call.1} parent=31 // pred_check_branch
          %196 = sbr.rel (%p194) target = $region40
        $region39: #{tpu_custom_call.1} parent=31 // pred_region
          %197 = dma.done [#allocation7], 64
        $region40: #{tpu_custom_call.1} parent=31 // pred_fallthru
          _
        %s198 = sand.u32 %s43, 1
        %s199 = scalar_lea.sflag [#allocation4], %s198
        %s200 = sand.u32 %s43, 1
        %s201 = smul.addr %s200, 8
        %s202 = scalar_lea.vmem [#allocation3], %s201
        %p203 = pneg %p56
        %p204 = pneg %p53
        %p205 = pneg %p77
        %p206 = pneg %p74
        %p207 = pneg %p98
        %p208 = pneg %p95
        %p209 = pneg %p124
        %p210 = pneg %p121
        %s211 = sand.u32 %s111, 1
        %s212 = scalar_lea.sflag [#allocation5], %s211
        %s213 = sand.u32 %s111, 1
        %s214 = scalar_lea.vmem [#allocation8], %s213
        %s215 = smul.u32 2, %s26
        %p216 = scmp.eq.s32.totalorder %s26, 0
        // Predicated region
        $region41: #{tpu_custom_call.1} parent=31 // pred_check
          %p217 = pneg %p216
        $region42: #{tpu_custom_call.1} parent=31 // pred_check_branch
          %219 = sbr.rel (%p217) target = $region44
        $region43: #{tpu_custom_call.1} parent=31 // pred_region
          %vm220 = vcmask 24576
          %221 = vst.msk [vmem:[#allocation2] sm:$0x1] %vm220, 0.0
        $region44: #{tpu_custom_call.1} parent=31 // pred_fallthru
          _
        %v222 = vld [vmem:[%s189] sm:$0xff]
        %v223 = vld [vmem:[#allocation2] sm:$0x1]
        %v225 = vcombine.high %v222, %v222
        %vm227 = vcmask 1043456
        %v228 = vsel %vm227, %v222, 0.0
        %v229 = vsel %vm227, %v225, 0.0
        %v230 = vadd.f32 %v228, %v229
        %231 = vadd.xlane.f32.xlu0 %v230
        %v232 = vpop.xlane.xlu0 %231
        %v234 = vlaneseq
        %v235 = vshrl.u32 %v234, 7
        %v236 = vsub.s32 0, %v235
        %v237 = vrot.slane %v232, %v236
        %v238 = vlaneseq
        %v239 = vshrl.u32 %v238, 7
        %v240 = vsub.s32 1, %v239
        %v241 = vrot.slane %v232, %v240
        %v242 = vlaneseq
        %v243 = vshrl.u32 %v242, 7
        %v244 = vsub.s32 2, %v243
        %v245 = vrot.slane %v232, %v244
        %v246 = vlaneseq
        %v247 = vshrl.u32 %v246, 7
        %v248 = vsub.s32 3, %v247
        %v249 = vrot.slane %v232, %v248
        %v250 = vcombine.low %v237, %v241
        %v251 = vcombine.low %v245, %v249
        %v253 = vunpack.c.l.s4 1966171168
        %v254 = vunpack.c.0.s8 %v253
        %v255 = vlaneseq
        %v256 = vshrl.u32 %v255, 7
        %v257 = vsub.s32 %v254, %v256
        %v258 = vrot.slane %v250, %v257
        %v260 = vunpack.c.l.s4 1966171168
        %v261 = vunpack.c.0.s8 %v260
        %v262 = vlaneseq
        %v263 = vshrl.u32 %v262, 7
        %v264 = vsub.s32 %v261, %v263
        %v265 = vrot.slane %v251, %v264
        %v266 = vcombine.low %v258, %v265
        %v268 = vunpack.c.l.s4 1966171168
        %v269 = vunpack.c.0.s8 %v268
        %v270 = vlaneseq
        %v271 = vshrl.u32 %v270, 7
        %v272 = vsub.s32 %v269, %v271
        %v273 = vrot.slane %v266, %v272
        %274 = vset.pattern.permute.xlu0 0
        %275 = vperm.xlu0 %274, %v273
        %v276 = vpop.permute.xlu0 %275
        %v277 = vlaneseq
        %v278 = vand.u32 %v277, 127
        %v279 = vlaneseq
        %v280 = vshrl.u32 %v279, 7
        %v281 = vsub.s32 %v278, %v280
        %v282 = vrot.slane %v276, %v281
        %v284 = vunpack.c.l.s4 1966171168
        %v285 = vunpack.c.0.s8 %v284
        %v286 = vlaneseq
        %v287 = vshrl.u32 %v286, 7
        %v288 = vsub.s32 %v285, %v287
        %v289 = vrot.slane %v282, %v288
        %v291 = vunpack.c.l.s4 1966171168
        %v292 = vunpack.c.0.s8 %v291
        %v293 = vlaneseq
        %v294 = vshrl.u32 %v293, 7
        %v295 = vsub.s32 %v292, %v294
        %v296 = vrot.slane %v289, %v295
        %v298 = vadd.f32 %v223, %v296
        %vm299 = vcmask 24576
        %300 = vst.msk [vmem:[#allocation2] sm:$0x1] %vm299, %v298
        // Predicated region
        $region45: #{tpu_custom_call.1} parent=31 // pred_check
          %p301 = pneg %p216
        $region46: #{tpu_custom_call.1} parent=31 // pred_check_branch
          %303 = sbr.rel (%p301) target = $region48
        $region47: #{tpu_custom_call.1} parent=31 // pred_region
          %v304 = vld [vmem:[#allocation2] sm:$0x1]
          %v305 = vld [vmem:[#allocation6] sm:$0xf]
          %v306 = vld [vmem:[%s2] sm:$0x1]
          %vm307 = vcmask 31744
          %v309 = vsel %vm307, %v304, 0
          %v312 = vsel %vm227, %v305, 0
          %314 = vmatprep.subr.mxu0 0.0
          %315 = vmatpush1.msra.mxu0 0.0
          %316 = vmatprep.subr.mxu0 0.0
          %317 = vmatpush1.msra.mxu0 0.0
          %318 = vmatprep.subr.mxu0 0.0
          %319 = vmatpush1.msra.mxu0 0.0
          %320 = vmatprep.subr.mxu0 0.0
          %321 = vmatpush1.msra.mxu0 0.0
          %322 = vmatprep.subr.mxu0 0.0
          %323 = vmatpush1.msra.mxu0 0.0
          %324 = vmatprep.subr.mxu0 0.0
          %325 = vmatpush1.msra.mxu0 0.0
          %326 = vmatprep.subr.mxu0 0.0
          %327 = vmatpush1.msra.mxu0 0.0
          %328 = vmatprep.subr.mxu0 0.0
          %329 = vmatpush1.msra.mxu0 0.0
          %330 = vmatprep.subr.mxu0 0.0
          %331 = vmatpush1.msra.mxu0 0.0
          %332 = vmatprep.subr.mxu0 0.0
          %333 = vmatpush1.msra.mxu0 0.0
          %334 = vmatprep.subr.mxu0 0.0
          %335 = vmatpush1.msra.mxu0 0.0
          %336 = vmatprep.subr.mxu0 0.0
          %337 = vmatpush1.msra.mxu0 0.0
          %338 = vmatprep.subr.mxu0 0.0
          %339 = vmatpush1.msra.mxu0 0.0
          %340 = vmatprep.subr.mxu0 0.0
          %341 = vmatpush1.msra.mxu0 0.0
          %342 = vmatprep.subr.mxu0 0.0
          %343 = vmatpush1.msra.mxu0 0.0
          %344 = vmatprep.subr.mxu0 0.0
          %345 = vmatpush1.msra.mxu0 %v312
          %346 = vmatprep.subr.mxu0 0.0
          %347 = vmatpush2.msra.mxu0 0.0
          %348 = vmatprep.subr.mxu0 0.0
          %349 = vmatpush2.msra.mxu0 0.0
          %350 = vmatprep.subr.mxu0 0.0
          %351 = vmatpush2.msra.mxu0 0.0
          %352 = vmatprep.subr.mxu0 0.0
          %353 = vmatpush2.msra.mxu0 0.0
          %354 = vmatprep.subr.mxu0 0.0
          %355 = vmatpush2.msra.mxu0 0.0
          %356 = vmatprep.subr.mxu0 0.0
          %357 = vmatpush2.msra.mxu0 0.0
          %358 = vmatprep.subr.mxu0 0.0
          %359 = vmatpush2.msra.mxu0 0.0
          %360 = vmatprep.subr.mxu0 0.0
          %361 = vmatpush2.msra.mxu0 0.0
          %362 = vmatprep.subr.mxu0 0.0
          %363 = vmatpush2.msra.mxu0 0.0
          %364 = vmatprep.subr.mxu0 0.0
          %365 = vmatpush2.msra.mxu0 0.0
          %366 = vmatprep.subr.mxu0 0.0
          %367 = vmatpush2.msra.mxu0 0.0
          %368 = vmatprep.subr.mxu0 0.0
          %369 = vmatpush2.msra.mxu0 0.0
          %370 = vmatprep.subr.mxu0 0.0
          %371 = vmatpush2.msra.mxu0 0.0
          %372 = vmatprep.subr.mxu0 0.0
          %373 = vmatpush2.msra.mxu0 0.0
          %374 = vmatprep.subr.mxu0 0.0
          %375 = vmatpush2.msra.mxu0 0.0
          %376 = vmatprep.subr.mxu0 0.0
          %377 = vmatpush2.msra.mxu0 0.0
          %378 = vmatprep.mubr.f32.mxu0 0.0
          %379 = vmatmul.mubr.f32.gmra.mxu0 %v309
          %v380 = vpop.f32.mrf.mxu0
          %v381 = vadd.f32 %v306, %v380
          %v382 = vpop.f32.mrf.mxu0
          %383 = vdwg.mxu0
          %vm384 = vcmask 16384
          %385 = vst.msk [vmem:[%s214] sm:$0x1] %vm384, %v381
        $region48: #{tpu_custom_call.1} parent=31 // pred_fallthru
          _
        %s386 = sand.u32 %s111, 1
        %s387 = scalar_lea.sflag [#allocation5], %s386
        %s388 = sand.u32 %s111, 1
        %s389 = scalar_lea.vmem [#allocation8], %s388
        // Predicated region
        $region49: #{tpu_custom_call.1} parent=31 // pred_check
          %p390 = pneg %p121
        $region50: #{tpu_custom_call.1} parent=31 // pred_check_branch
          %392 = sbr.rel (%p390) target = $region52
        $region51: #{tpu_custom_call.1} parent=31 // pred_region
          %s394 = ssub.s32 16, 16
          %395 = vsyncadd %s387, %s394
          %s396 = smul.addr %s25, 16
          %s397 = scalar_lea.hbm %s3, %s396
          %s399 = sshll.u32 %s389, 4
          %s400 = int_to_ptr.vmem [resolvable:$true] %s399
          %402 = dma.vmem_to_hbm [thread:$0]  %s400, 16, %s397, %s387
        $region52: #{tpu_custom_call.1} parent=31 // pred_fallthru
          _
      $region32: #{tpu_custom_call.1} parent=5 // pred_fallthru
        _
      %p403 = scmp.le.s32.totalorder 2, %s16
      // Predicated region
      $region53: #{tpu_custom_call.1} parent=5 // pred_check
        %p404 = pneg %p403
      $region54: #{tpu_custom_call.1} parent=5 // pred_check_branch
        %406 = sbr.rel (%p404) target = $region56
      $region55: #{tpu_custom_call.1} parent=5 // pred_region
        %s407 = ssub.s32 %s16, 2
        // Predicated region
        $region57: #{tpu_custom_call.1} parent=55 // pred_check
          %p408 = pneg %p127
        $region58: #{tpu_custom_call.1} parent=55 // pred_check_branch
          %410 = sbr.rel (%p408) target = $region60
        $region59: #{tpu_custom_call.1} parent=55 // pred_region
          %s411 = sand.u32 %s112, 1
          %s412 = scalar_lea.sflag [#allocation5], %s411
          %s413 = sand.u32 %s112, 1
          %s414 = scalar_lea.vmem [#allocation8], %s413
          %415 = dma.done %s412, 16
        $region60: #{tpu_custom_call.1} parent=55 // pred_fallthru
          _
      $region56: #{tpu_custom_call.1} parent=5 // pred_fallthru
        _
    $region6: #{tpu_custom_call.1} parent=1 // loop_footer
      %s20 = sadd.s32 1, %s16
    $region7: #{tpu_custom_call.1} parent=1 // loop_footer_branch
      %15 = sbr.rel target = $region3
    $region8: #{tpu_custom_call.1} parent=1 // loop_exit
      _
    %416 = vsyncpa [#allocation4], 1
    %s417 = scalar_lea.sflag [#allocation4], 1
    %418 = vsyncpa %s417, 1
    %419 = vsyncpa [#allocation7], 1
    %420 = vsyncpa [#allocation5], 1
    %s421 = scalar_lea.sflag [#allocation5], 1
    %422 = vsyncpa %s421, 1

</llo_original>
